<compile_context>
chip_gen: v5e
topology: v5e:2x2
jax: 0.10.0
libtpu: 0.0.40
codegen_flags: <defaults>
</compile_context>

<pallas_src>
import functools

import jax
import jax.numpy as jnp
from jax.experimental import pallas as pl
from jax.experimental.pallas import tpu as pltpu

EPS = 1e-6


def decoder_kernel(alpha_ref, bias_ref, x_ref, o_ref):
    """Applies n_layers sequential LayerNorms on one resident row-tile.

    alpha_ref, bias_ref : SMEM f32[n_layers]  (per-layer scalar params)
    x_ref, o_ref        : VMEM f32[TILE_R, D]
    """
    n_layers = alpha_ref.shape[0]
    d = x_ref.shape[-1]
    inv_dm1 = 1.0 / (d - 1)  # PyTorch std() is unbiased (divides by D - 1)

    # Stage the running activation in o_ref so Mosaic doesn't materialize an
    # extra full-tile VMEM temp for the value carried across the unrolled
    # layer loop; VMEM stays bounded by the 4 pipelined blocks (2 in + 2 out).
    o_ref[...] = x_ref[...]

    # Static unroll over layers: n_layers is small & static (LLO visibility).
    for i in range(n_layers):
        x = o_ref[...].astype(jnp.float32)
        mean = jnp.mean(x, axis=-1, keepdims=True)
        xc = x - mean                                   # reused for var & output
        var = jnp.sum(xc * xc, axis=-1, keepdims=True) * inv_dm1
        std = jnp.sqrt(var)
        # Tiny (TILE_R, 1) reciprocal instead of a full-tile divide; exact
        # (approx=False) so results stay within 1e-5 of the PyTorch math.
        inv = pl.reciprocal(std + EPS, approx=False)
        scale = alpha_ref[i] * inv                      # fuse alpha into inv
        o_ref[...] = (xc * scale + bias_ref[i]).astype(o_ref.dtype)


def _round_up(x, m):
    return (x + m - 1) // m * m


def _pick_tile_rows(rows, bytes_per_row):
    # ~4 MiB blocks amortize the ~0.35 us per-grid-step overhead to <10%;
    # 2 in-buffers + 2 out-buffers at 4 MiB = 16 MiB, well inside the limit.
    target_block_bytes = 4 * 1024 * 1024
    tile_r = max(8, target_block_bytes // max(bytes_per_row, 1))
    # Keep >= ~4 grid steps when there is enough work so the "parallel" row
    # axis can still be sharded across the 2 TensorCores on v7x.
    min_steps = 4
    if rows > min_steps * 8:
        tile_r = min(tile_r, _round_up(pl.cdiv(rows, min_steps), 8))
    tile_r = min(tile_r, _round_up(rows, 8))
    return _round_up(tile_r, 8)


@functools.partial(jax.jit, donate_argnums=(0,))
def decoder_forward(x, encoder_output, src_mask, tgt_mask, alphas, biases):
    """x: (B, S, D) float32.  encoder_output / masks unused (see TODO above).

    x is donated so the input_output_alias below is a true in-place update
    (no defensive HBM copy); callers must not reuse x afterwards.
    """
    del encoder_output, src_mask, tgt_mask
    B, S, D = x.shape
    assert D > 1, "d_model must be > 1 (unbiased std divides by D - 1)"

    rows = B * S
    bytes_per_row = D * jnp.dtype(x.dtype).itemsize
    tile_r = _pick_tile_rows(rows, bytes_per_row)

    x2 = x.reshape(rows, D)

    # No padding: Pallas handles the partial last block (row-local math, OOB
    # writes dropped), so we avoid the extra pad/slice HBM passes.
    grid = (pl.cdiv(rows, tile_r),)

    out = pl.pallas_call(
        decoder_kernel,
        out_shape=jax.ShapeDtypeStruct((rows, D), x.dtype),
        grid=grid,
        in_specs=[
            pl.BlockSpec(memory_space=pltpu.MemorySpace.SMEM),   # alphas
            pl.BlockSpec(memory_space=pltpu.MemorySpace.SMEM),   # biases
            pl.BlockSpec((tile_r, D), lambda i: (i, 0)),         # x row-tile
        ],
        out_specs=pl.BlockSpec((tile_r, D), lambda i: (i, 0)),
        input_output_aliases={2: 0},  # reuse x's HBM buffer for the output
        compiler_params=pltpu.CompilerParams(
            dimension_semantics=("parallel",),
            vmem_limit_bytes=40 * 1024 * 1024,
        ),
    )(alphas, biases, x2)

    return out.reshape(B, S, D)


def reference_forward(x, alphas, biases):
    """Pure-JAX reference (matches PyTorch LayerNorm stack) for correctness."""
    d = x.shape[-1]
    for a, b in zip(alphas, biases):
        mean = jnp.mean(x, axis=-1, keepdims=True)
        var = jnp.sum((x - mean) ** 2, axis=-1, keepdims=True) / (d - 1)
        std = jnp.sqrt(var)
        x = a * (x - mean) / (std + EPS) + b
    return x


if __name__ == "__main__":
    key = jax.random.PRNGKey(0)
    kx, ke = jax.random.split(key)

    # Small transformer-ish shapes. D = 128 keeps the output block lane-dense
    # (last dim a multiple of 128), per the TPU layout guidance.
    B, S_tgt, S_src, D = 2, 8, 8, 128
    n_layers = 3

    x = jax.random.normal(kx, (B, S_tgt, D), dtype=jnp.float32)
    encoder_output = jax.random.normal(ke, (B, S_src, D), dtype=jnp.float32)
    src_mask = jnp.ones((B, 1, S_src), dtype=jnp.float32)
    tgt_mask = jnp.tril(jnp.ones((S_tgt, S_tgt), dtype=jnp.float32))[None]

    # Parameters exactly as in the PyTorch __init__: torch.ones(1) each layer.
    alphas = jnp.ones((n_layers,), dtype=jnp.float32)
    biases = jnp.ones((n_layers,), dtype=jnp.float32)

    # Compute the reference BEFORE the kernel: x is donated (in-place update).
    ref = reference_forward(x, alphas, biases)

    out = decoder_forward(x, encoder_output, src_mask, tgt_mask, alphas, biases)
    out = jax.block_until_ready(out)

    assert out.shape == (B, S_tgt, D)
    assert jnp.allclose(out, ref, atol=1e-5, rtol=1e-5), "mismatch vs reference"

    print("KERNEL_OK")
</pallas_src>

<mosaic_0001>
module attributes {stable_mosaic.version = 11 : i64} {
  func.func @decoder_kernel(%arg0: i32, %arg1: memref<3xf32, #tpu.memory_space<smem>>, %arg2: memref<3xf32, #tpu.memory_space<smem>>, %arg3: memref<16x128xf32, #tpu.memory_space<vmem>>, %arg4: memref<16x128xf32, #tpu.memory_space<vmem>>) attributes {dimension_semantics = [#tpu.dimension_semantics<parallel>], iteration_bounds = array<i64: 1>, scalar_prefetch = 0 : i64, scratch_operands = 0 : i64, tpu.core_type = #tpu.core_type<tc>, window_params = [{transform_indices = @transform_0, window_bounds = array<i64: 3>}, {transform_indices = @transform_1, window_bounds = array<i64: 3>}, {transform_indices = @transform_2, window_bounds = array<i64: 16, 128>}, {transform_indices = @transform_3, window_bounds = array<i64: 16, 128>}]} {
    %c0 = arith.constant 0 : index
    %c0_0 = arith.constant 0 : index
    %0 = vector.load %arg3[%c0, %c0_0] : memref<16x128xf32, #tpu.memory_space<vmem>>, vector<16x128xf32>
    %c0_1 = arith.constant 0 : index
    %c0_2 = arith.constant 0 : index
    %1 = vector.load %arg4[%c0_1, %c0_2] : memref<16x128xf32, #tpu.memory_space<vmem>>, vector<16x128xf32>
    tpu.vector_store %arg4[%c0_1, %c0_2], %0 {strides = array<i32>} : memref<16x128xf32, #tpu.memory_space<vmem>>, vector<16x128xf32>,
    %c0_3 = arith.constant 0 : index
    %c0_4 = arith.constant 0 : index
    %2 = vector.load %arg4[%c0_3, %c0_4] : memref<16x128xf32, #tpu.memory_space<vmem>>, vector<16x128xf32>
    %cst = arith.constant dense<0.000000e+00> : vector<16xf32>
    %3 = vector.multi_reduction <add>, %2, %cst [1] : vector<16x128xf32> to vector<16xf32>
    %4 = vector.shape_cast %3 : vector<16xf32> to vector<16x1xf32>
    %cst_5 = arith.constant 1.280000e+02 : f32
    %5 = vector.broadcast %cst_5 : f32 to vector<16x1xf32>
    %6 = arith.divf %4, %5 : vector<16x1xf32>
    %7 = vector.broadcast %6 : vector<16x1xf32> to vector<16x128xf32>
    %8 = arith.subf %2, %7 : vector<16x128xf32>
    %9 = arith.mulf %8, %8 : vector<16x128xf32>
    %cst_6 = arith.constant dense<0.000000e+00> : vector<16xf32>
    %10 = vector.multi_reduction <add>, %9, %cst_6 [1] : vector<16x128xf32> to vector<16xf32>
    %11 = vector.shape_cast %10 : vector<16xf32> to vector<16x1xf32>
    %cst_7 = arith.constant 0.00787401571 : f32
    %12 = vector.broadcast %cst_7 : f32 to vector<16x1xf32>
    %13 = arith.mulf %11, %12 : vector<16x1xf32>
    %14 = math.sqrt %13 : vector<16x1xf32>
    %cst_8 = arith.constant 9.99999997E-7 : f32
    %15 = vector.broadcast %cst_8 : f32 to vector<16x1xf32>
    %16 = arith.addf %14, %15 : vector<16x1xf32>
    %17 = tpu.reciprocal %16 : vector<16x1xf32> -> vector<16x1xf32>
    %c0_9 = arith.constant 0 : index
    %18 = memref.load %arg1[%c0_9] : memref<3xf32, #tpu.memory_space<smem>>
    %19 = vector.broadcast %18 : f32 to vector<16x1xf32>
    %20 = arith.mulf %19, %17 : vector<16x1xf32>
    %21 = vector.broadcast %20 : vector<16x1xf32> to vector<16x128xf32>
    %22 = arith.mulf %8, %21 : vector<16x128xf32>
    %c0_10 = arith.constant 0 : index
    %23 = memref.load %arg2[%c0_10] : memref<3xf32, #tpu.memory_space<smem>>
    %24 = vector.broadcast %23 : f32 to vector<16x128xf32>
    %25 = arith.addf %22, %24 : vector<16x128xf32>
    %c0_11 = arith.constant 0 : index
    %c0_12 = arith.constant 0 : index
    %26 = vector.load %arg4[%c0_11, %c0_12] : memref<16x128xf32, #tpu.memory_space<vmem>>, vector<16x128xf32>
    tpu.vector_store %arg4[%c0_11, %c0_12], %25 {strides = array<i32>} : memref<16x128xf32, #tpu.memory_space<vmem>>, vector<16x128xf32>,
    %c0_13 = arith.constant 0 : index
    %c0_14 = arith.constant 0 : index
    %27 = vector.load %arg4[%c0_13, %c0_14] : memref<16x128xf32, #tpu.memory_space<vmem>>, vector<16x128xf32>
    %cst_15 = arith.constant dense<0.000000e+00> : vector<16xf32>
    %28 = vector.multi_reduction <add>, %27, %cst_15 [1] : vector<16x128xf32> to vector<16xf32>
    %29 = vector.shape_cast %28 : vector<16xf32> to vector<16x1xf32>
    %cst_16 = arith.constant 1.280000e+02 : f32
    %30 = vector.broadcast %cst_16 : f32 to vector<16x1xf32>
    %31 = arith.divf %29, %30 : vector<16x1xf32>
    %32 = vector.broadcast %31 : vector<16x1xf32> to vector<16x128xf32>
    %33 = arith.subf %27, %32 : vector<16x128xf32>
    %34 = arith.mulf %33, %33 : vector<16x128xf32>
    %cst_17 = arith.constant dense<0.000000e+00> : vector<16xf32>
    %35 = vector.multi_reduction <add>, %34, %cst_17 [1] : vector<16x128xf32> to vector<16xf32>
    %36 = vector.shape_cast %35 : vector<16xf32> to vector<16x1xf32>
    %cst_18 = arith.constant 0.00787401571 : f32
    %37 = vector.broadcast %cst_18 : f32 to vector<16x1xf32>
    %38 = arith.mulf %36, %37 : vector<16x1xf32>
    %39 = math.sqrt %38 : vector<16x1xf32>
    %cst_19 = arith.constant 9.99999997E-7 : f32
    %40 = vector.broadcast %cst_19 : f32 to vector<16x1xf32>
    %41 = arith.addf %39, %40 : vector<16x1xf32>
    %42 = tpu.reciprocal %41 : vector<16x1xf32> -> vector<16x1xf32>
    %c1 = arith.constant 1 : index
    %43 = memref.load %arg1[%c1] : memref<3xf32, #tpu.memory_space<smem>>
    %44 = vector.broadcast %43 : f32 to vector<16x1xf32>
    %45 = arith.mulf %44, %42 : vector<16x1xf32>
    %46 = vector.broadcast %45 : vector<16x1xf32> to vector<16x128xf32>
    %47 = arith.mulf %33, %46 : vector<16x128xf32>
    %c1_20 = arith.constant 1 : index
    %48 = memref.load %arg2[%c1_20] : memref<3xf32, #tpu.memory_space<smem>>
    %49 = vector.broadcast %48 : f32 to vector<16x128xf32>
    %50 = arith.addf %47, %49 : vector<16x128xf32>
    %c0_21 = arith.constant 0 : index
    %c0_22 = arith.constant 0 : index
    %51 = vector.load %arg4[%c0_21, %c0_22] : memref<16x128xf32, #tpu.memory_space<vmem>>, vector<16x128xf32>
    tpu.vector_store %arg4[%c0_21, %c0_22], %50 {strides = array<i32>} : memref<16x128xf32, #tpu.memory_space<vmem>>, vector<16x128xf32>,
    %c0_23 = arith.constant 0 : index
    %c0_24 = arith.constant 0 : index
    %52 = vector.load %arg4[%c0_23, %c0_24] : memref<16x128xf32, #tpu.memory_space<vmem>>, vector<16x128xf32>
    %cst_25 = arith.constant dense<0.000000e+00> : vector<16xf32>
    %53 = vector.multi_reduction <add>, %52, %cst_25 [1] : vector<16x128xf32> to vector<16xf32>
    %54 = vector.shape_cast %53 : vector<16xf32> to vector<16x1xf32>
    %cst_26 = arith.constant 1.280000e+02 : f32
    %55 = vector.broadcast %cst_26 : f32 to vector<16x1xf32>
    %56 = arith.divf %54, %55 : vector<16x1xf32>
    %57 = vector.broadcast %56 : vector<16x1xf32> to vector<16x128xf32>
    %58 = arith.subf %52, %57 : vector<16x128xf32>
    %59 = arith.mulf %58, %58 : vector<16x128xf32>
    %cst_27 = arith.constant dense<0.000000e+00> : vector<16xf32>
    %60 = vector.multi_reduction <add>, %59, %cst_27 [1] : vector<16x128xf32> to vector<16xf32>
    %61 = vector.shape_cast %60 : vector<16xf32> to vector<16x1xf32>
    %cst_28 = arith.constant 0.00787401571 : f32
    %62 = vector.broadcast %cst_28 : f32 to vector<16x1xf32>
    %63 = arith.mulf %61, %62 : vector<16x1xf32>
    %64 = math.sqrt %63 : vector<16x1xf32>
    %cst_29 = arith.constant 9.99999997E-7 : f32
    %65 = vector.broadcast %cst_29 : f32 to vector<16x1xf32>
    %66 = arith.addf %64, %65 : vector<16x1xf32>
    %67 = tpu.reciprocal %66 : vector<16x1xf32> -> vector<16x1xf32>
    %c2 = arith.constant 2 : index
    %68 = memref.load %arg1[%c2] : memref<3xf32, #tpu.memory_space<smem>>
    %69 = vector.broadcast %68 : f32 to vector<16x1xf32>
    %70 = arith.mulf %69, %67 : vector<16x1xf32>
    %71 = vector.broadcast %70 : vector<16x1xf32> to vector<16x128xf32>
    %72 = arith.mulf %58, %71 : vector<16x128xf32>
    %c2_30 = arith.constant 2 : index
    %73 = memref.load %arg2[%c2_30] : memref<3xf32, #tpu.memory_space<smem>>
    %74 = vector.broadcast %73 : f32 to vector<16x128xf32>
    %75 = arith.addf %72, %74 : vector<16x128xf32>
    %c0_31 = arith.constant 0 : index
    %c0_32 = arith.constant 0 : index
    %76 = vector.load %arg4[%c0_31, %c0_32] : memref<16x128xf32, #tpu.memory_space<vmem>>, vector<16x128xf32>
    tpu.vector_store %arg4[%c0_31, %c0_32], %75 {strides = array<i32>} : memref<16x128xf32, #tpu.memory_space<vmem>>, vector<16x128xf32>,
    return
  }
  func.func @transform_0(%arg0: i32) -> i32 {
    %c0_i32 = arith.constant 0 : i32
    %c0_i32_0 = arith.constant 0 : i32
    return %c0_i32 : i32
  }
  func.func @transform_1(%arg0: i32) -> i32 {
    %c0_i32 = arith.constant 0 : i32
    %c0_i32_0 = arith.constant 0 : i32
    return %c0_i32 : i32
  }
  func.func @transform_2(%arg0: i32) -> (i32, i32) {
    %c0_i32 = arith.constant 0 : i32
    %c0_i32_0 = arith.constant 0 : i32
    return %arg0, %c0_i32 : i32, i32
  }
  func.func @transform_3(%arg0: i32) -> (i32, i32) {
    %c0_i32 = arith.constant 0 : i32
    %c0_i32_0 = arith.constant 0 : i32
    return %arg0, %c0_i32 : i32, i32
  }
}

</mosaic_0001>

<llo_original>
// kernel: decoder_forward.1
$region0: #{decoder_forward.1}
  #allocation0 [shape = 'u32[]', space=smem, size = 0x4, offset = 0x4, fixed_abs, tag = 'smem constant byte address 0x4 - core index']
  #allocation1 [shape = 'u32[72,128]{1,0:T(1,128)}', space=vmem, size = 0x9000, scoped, tag = 'internal scratch']
  %s0 = inlined_call_operand.vmem [shape: f32[3], index: 0, kind: input, shape index: {}]
  %s1 = inlined_call_operand.vmem [shape: f32[3], index: 1, kind: input, shape index: {}]
  %s2 = inlined_call_operand.hbm [shape: f32[16,128], index: 2, kind: input, shape index: {}, may-alias: {2,3}]
  %s3 = inlined_call_operand.hbm [shape: f32[16,128], index: 3, kind: output, shape index: {}, may-alias: {2,3}]
  %s4 = sld [smem:[#allocation0]]
  $region34: #{decoder_forward.1} parent=0
    _
  %s6 = ssub.s32 1, %s4
  %s7 = scalar_select 0, %s6, %s4
  $region1: #{decoder_forward.1} parent=0
    #allocation2 [shape = 'u8[512]{0}', space=smem, size = 0x200, scoped, tag = 'input window, operand 0, single buffered']
    #allocation3 [shape = 's32[1]{0}', space=sflag, size = 0x4, scoped, tag = 'scoped memory for decoder_forward.1']
    #allocation4 [shape = 's32[1]{0}', space=sflag, size = 0x4, scoped, tag = 'scoped memory for decoder_forward.1']
    #allocation5 [shape = 's32[1]{0}', space=sflag, size = 0x4, scoped, tag = 'scoped memory for decoder_forward.1']
    #allocation6 [shape = 'u8[512]{0}', space=smem, size = 0x200, scoped, tag = 'input window, operand 1, single buffered']
    #allocation7 [shape = 's32[1]{0}', space=sflag, size = 0x4, scoped, tag = 'scoped memory for decoder_forward.1']
    #allocation8 [shape = 'u8[8192]{0}', space=vmem, size = 0x2000, scoped, tag = 'input window, operand 2, single buffered']
    #allocation9 [shape = 'u8[8192]{0}', space=vmem, size = 0x2000, scoped, tag = 'output window, operand 0, single buffered']
    %8 = vsyncpa [#allocation5], 0
    %9 = vsyncpa [#allocation7], 0
    %10 = vsyncpa [#allocation3], 0
    %11 = vsyncpa [#allocation4], 0
    // Predicated region
    $region2: #{decoder_forward.1} parent=1 // pred_check
      _
    $region3: #{decoder_forward.1} parent=1 // pred_check_branch
      %13 = sbr.rel (0) target = $region5
    $region4: #{decoder_forward.1} parent=1 // pred_region
      %15 = vsyncadd [#allocation5], 0
      %s17 = sshll.u32 %s0, 4
      %s18 = int_to_ptr.vmem [resolvable:$true] %s17
      %20 = dma.vmem_to_smem %s18, 16, [#allocation2], [#allocation5]
    $region5: #{decoder_forward.1} parent=1 // pred_fallthru
      _
    // Predicated region
    $region6: #{decoder_forward.1} parent=1 // pred_check
      _
    $region7: #{decoder_forward.1} parent=1 // pred_check_branch
      %22 = sbr.rel (0) target = $region9
    $region8: #{decoder_forward.1} parent=1 // pred_region
      %24 = vsyncadd [#allocation7], 0
      %s26 = sshll.u32 %s1, 4
      %s27 = int_to_ptr.vmem [resolvable:$true] %s26
      %29 = dma.vmem_to_smem %s27, 16, [#allocation6], [#allocation7]
    $region9: #{decoder_forward.1} parent=1 // pred_fallthru
      _
    // Predicated region
    $region10: #{decoder_forward.1} parent=1 // pred_check
      _
    $region11: #{decoder_forward.1} parent=1 // pred_check_branch
      %31 = sbr.rel (0) target = $region13
    $region12: #{decoder_forward.1} parent=1 // pred_region
      %33 = vsyncadd [#allocation3], 0
      %s34 = sshll.u32 %s2, 4
      %s35 = int_to_ptr.hbm [resolvable:$true] %s34
      %s36 = sshll.u32 [#allocation8], 4
      %s37 = int_to_ptr.vmem [resolvable:$true] %s36
      %42 = dma.hbm_to_vmem [thread:$0]  %s35, 256, %s37, [#allocation3], 128, 128, 8
    $region13: #{decoder_forward.1} parent=1 // pred_fallthru
      _
    // Predicated region
    $region14: #{decoder_forward.1} parent=1 // pred_check
      _
    $region15: #{decoder_forward.1} parent=1 // pred_check_branch
      %44 = sbr.rel (0) target = $region17
    $region16: #{decoder_forward.1} parent=1 // pred_region
      %46 = dma.done [#allocation5], 16
    $region17: #{decoder_forward.1} parent=1 // pred_fallthru
      _
    // Predicated region
    $region18: #{decoder_forward.1} parent=1 // pred_check
      _
    $region19: #{decoder_forward.1} parent=1 // pred_check_branch
      %48 = sbr.rel (0) target = $region21
    $region20: #{decoder_forward.1} parent=1 // pred_region
      %50 = dma.done [#allocation7], 16
    $region21: #{decoder_forward.1} parent=1 // pred_fallthru
      _
    // Predicated region
    $region22: #{decoder_forward.1} parent=1 // pred_check
      _
    $region23: #{decoder_forward.1} parent=1 // pred_check_branch
      %52 = sbr.rel (0) target = $region25
    $region24: #{decoder_forward.1} parent=1 // pred_region
      %54 = dma.done [#allocation3], 256
    $region25: #{decoder_forward.1} parent=1 // pred_fallthru
      _
    %55 = sfence
    %v56 = vld [vmem:[#allocation8] sm:$0xff]
    %v57 = vld [vmem:[#allocation8 + $0x8] sm:$0xff]
    %58 = vst [vmem:[#allocation9] sm:$0xff] %v56
    %59 = vst [vmem:[#allocation9 + $0x8] sm:$0xff] %v57
    %v60 = vld [vmem:[#allocation9] sm:$0xff]
    %v61 = vld [vmem:[#allocation9 + $0x8] sm:$0xff]
    %62 = vadd.xlane.f32.xlu0 %v60
    %v63 = vpop.xlane.xlu0 %62
    %64 = vadd.xlane.f32.xlu0 %v61
    %v65 = vpop.xlane.xlu0 %64
    %v66 = vrcp.pop 128.0
    %v67 = vmul.f32 128.0, %v66
    %v68 = vsub.f32 1.0, %v67
    %v69 = vmul.f32 %v66, %v68
    %v70 = vadd.f32 %v66, %v69
    %vm71 = vweird.f32 %v66
    %v72 = vsel %vm71, %v66, %v70
    %v73 = vmul.f32 %v63, %v72
    %v74 = vmul.f32 %v65, %v72
    %v75 = vsub.f32 %v60, %v73
    %v76 = vsub.f32 %v61, %v74
    %v77 = vmul.f32 %v75, %v75
    %v78 = vmul.f32 %v76, %v76
    %79 = vadd.xlane.f32.xlu0 %v77
    %v80 = vpop.xlane.xlu0 %79
    %81 = vadd.xlane.f32.xlu0 %v78
    %v82 = vpop.xlane.xlu0 %81
    %v83 = vmul.f32 %v80, 0.007874016
    %v84 = vmul.f32 %v82, 0.007874016
    %v85 = vrsqrt.pop %v83
    %v86 = vmul.f32 %v85, %v83
    %v87 = vmul.f32 %v86, %v85
    %v88 = vmul.f32 0.5, %v87
    %v89 = vsub.f32 1.5, %v88
    %v90 = vmul.f32 %v85, %v89
    %v91 = vmul.f32 %v83, %v90
    %vm92 = vcmp.eq.f32.partialorder %v83, inf
    %v93 = vsel %vm92, %v83, %v91
    %vm94 = vcmp.eq.f32.partialorder %v83, 0.0
    %v95 = vand.u32 %v83, 2147483648
    %v96 = vsel %vm94, %v95, %v93
    %v97 = vrsqrt.pop %v84
    %v98 = vmul.f32 %v97, %v84
    %v99 = vmul.f32 %v98, %v97
    %v100 = vmul.f32 0.5, %v99
    %v101 = vsub.f32 1.5, %v100
    %v102 = vmul.f32 %v97, %v101
    %v103 = vmul.f32 %v84, %v102
    %vm104 = vcmp.eq.f32.partialorder %v84, inf
    %v105 = vsel %vm104, %v84, %v103
    %vm106 = vcmp.eq.f32.partialorder %v84, 0.0
    %v107 = vand.u32 %v84, 2147483648
    %v108 = vsel %vm106, %v107, %v105
    %v109 = vadd.f32 %v96, 1e-06
    %v110 = vadd.f32 %v108, 1e-06
    %v111 = vrcp.pop %v109
    %v112 = vmul.f32 %v109, %v111
    %v113 = vsub.f32 1.0, %v112
    %v114 = vmul.f32 %v111, %v113
    %v115 = vadd.f32 %v111, %v114
    %vm116 = vweird.f32 %v109
    %vm117 = vweird.f32 %v111
    %vm118 = vmor %vm116, %vm117
    %v119 = vsel %vm118, %v111, %v115
    %v120 = vand.u32 2147483647, %v109
    %vm121 = vcmp.eq.f32.partialorder %v120, 8.507059e+37
    %v122 = vand.u32 %v109, 2147483648
    %v123 = vor.u32 1.1754944e-38, %v122
    %v124 = vsel %vm121, %v123, %v119
    %v125 = vrcp.pop %v110
    %v126 = vmul.f32 %v110, %v125
    %v127 = vsub.f32 1.0, %v126
    %v128 = vmul.f32 %v125, %v127
    %v129 = vadd.f32 %v125, %v128
    %vm130 = vweird.f32 %v110
    %vm131 = vweird.f32 %v125
    %vm132 = vmor %vm130, %vm131
    %v133 = vsel %vm132, %v125, %v129
    %v134 = vand.u32 2147483647, %v110
    %vm135 = vcmp.eq.f32.partialorder %v134, 8.507059e+37
    %v136 = vand.u32 %v110, 2147483648
    %v137 = vor.u32 1.1754944e-38, %v136
    %v138 = vsel %vm135, %v137, %v133
    %s139 = sld [smem:[#allocation2]]
    %v140 = vstv %s139
    %v141 = vmul.f32 %v140, %v124
    %v142 = vmul.f32 %v140, %v138
    %v143 = vmul.f32 %v75, %v141
    %v144 = vmul.f32 %v76, %v142
    %s145 = sld [smem:[#allocation6]]
    %v146 = vstv %s145
    %v147 = vadd.f32 %v143, %v146
    %v148 = vadd.f32 %v144, %v146
    %149 = vst [vmem:[#allocation9] sm:$0xff] %v147
    %150 = vst [vmem:[#allocation9 + $0x8] sm:$0xff] %v148
    %v151 = vld [vmem:[#allocation9] sm:$0xff]
    %v152 = vld [vmem:[#allocation9 + $0x8] sm:$0xff]
    %153 = vadd.xlane.f32.xlu0 %v151
    %v154 = vpop.xlane.xlu0 %153
    %155 = vadd.xlane.f32.xlu0 %v152
    %v156 = vpop.xlane.xlu0 %155
    %v157 = vmul.f32 %v154, %v72
    %v158 = vmul.f32 %v156, %v72
    %v159 = vsub.f32 %v151, %v157
    %v160 = vsub.f32 %v152, %v158
    %v161 = vmul.f32 %v159, %v159
    %v162 = vmul.f32 %v160, %v160
    %163 = vadd.xlane.f32.xlu0 %v161
    %v164 = vpop.xlane.xlu0 %163
    %165 = vadd.xlane.f32.xlu0 %v162
    %v166 = vpop.xlane.xlu0 %165
    %v167 = vmul.f32 %v164, 0.007874016
    %v168 = vmul.f32 %v166, 0.007874016
    %v169 = vrsqrt.pop %v167
    %v170 = vmul.f32 %v169, %v167
    %v171 = vmul.f32 %v170, %v169
    %v172 = vmul.f32 0.5, %v171
    %v173 = vsub.f32 1.5, %v172
    %v174 = vmul.f32 %v169, %v173
    %v175 = vmul.f32 %v167, %v174
    %vm176 = vcmp.eq.f32.partialorder %v167, inf
    %v177 = vsel %vm176, %v167, %v175
    %vm178 = vcmp.eq.f32.partialorder %v167, 0.0
    %v179 = vand.u32 %v167, 2147483648
    %v180 = vsel %vm178, %v179, %v177
    %v181 = vrsqrt.pop %v168
    %v182 = vmul.f32 %v181, %v168
    %v183 = vmul.f32 %v182, %v181
    %v184 = vmul.f32 0.5, %v183
    %v185 = vsub.f32 1.5, %v184
    %v186 = vmul.f32 %v181, %v185
    %v187 = vmul.f32 %v168, %v186
    %vm188 = vcmp.eq.f32.partialorder %v168, inf
    %v189 = vsel %vm188, %v168, %v187
    %vm190 = vcmp.eq.f32.partialorder %v168, 0.0
    %v191 = vand.u32 %v168, 2147483648
    %v192 = vsel %vm190, %v191, %v189
    %v193 = vadd.f32 %v180, 1e-06
    %v194 = vadd.f32 %v192, 1e-06
    %v195 = vrcp.pop %v193
    %v196 = vmul.f32 %v193, %v195
    %v197 = vsub.f32 1.0, %v196
    %v198 = vmul.f32 %v195, %v197
    %v199 = vadd.f32 %v195, %v198
    %vm200 = vweird.f32 %v193
    %vm201 = vweird.f32 %v195
    %vm202 = vmor %vm200, %vm201
    %v203 = vsel %vm202, %v195, %v199
    %v204 = vand.u32 2147483647, %v193
    %vm205 = vcmp.eq.f32.partialorder %v204, 8.507059e+37
    %v206 = vand.u32 %v193, 2147483648
    %v207 = vor.u32 1.1754944e-38, %v206
    %v208 = vsel %vm205, %v207, %v203
    %v209 = vrcp.pop %v194
    %v210 = vmul.f32 %v194, %v209
    %v211 = vsub.f32 1.0, %v210
    %v212 = vmul.f32 %v209, %v211
    %v213 = vadd.f32 %v209, %v212
    %vm214 = vweird.f32 %v194
    %vm215 = vweird.f32 %v209
    %vm216 = vmor %vm214, %vm215
    %v217 = vsel %vm216, %v209, %v213
    %v218 = vand.u32 2147483647, %v194
    %vm219 = vcmp.eq.f32.partialorder %v218, 8.507059e+37
    %v220 = vand.u32 %v194, 2147483648
    %v221 = vor.u32 1.1754944e-38, %v220
    %v222 = vsel %vm219, %v221, %v217
    %s223 = sld [smem:[#allocation2 + $0x1]]
    %v224 = vstv %s223
    %v225 = vmul.f32 %v224, %v208
    %v226 = vmul.f32 %v224, %v222
    %v227 = vmul.f32 %v159, %v225
    %v228 = vmul.f32 %v160, %v226
    %s229 = sld [smem:[#allocation6 + $0x1]]
    %v230 = vstv %s229
    %v231 = vadd.f32 %v227, %v230
    %v232 = vadd.f32 %v228, %v230
    %233 = vst [vmem:[#allocation9] sm:$0xff] %v231
    %234 = vst [vmem:[#allocation9 + $0x8] sm:$0xff] %v232
    %v235 = vld [vmem:[#allocation9] sm:$0xff]
    %v236 = vld [vmem:[#allocation9 + $0x8] sm:$0xff]
    %237 = vadd.xlane.f32.xlu0 %v235
    %v238 = vpop.xlane.xlu0 %237
    %239 = vadd.xlane.f32.xlu0 %v236
    %v240 = vpop.xlane.xlu0 %239
    %v241 = vmul.f32 %v238, %v72
    %v242 = vmul.f32 %v240, %v72
    %v243 = vsub.f32 %v235, %v241
    %v244 = vsub.f32 %v236, %v242
    %v245 = vmul.f32 %v243, %v243
    %v246 = vmul.f32 %v244, %v244
    %247 = vadd.xlane.f32.xlu0 %v245
    %v248 = vpop.xlane.xlu0 %247
    %249 = vadd.xlane.f32.xlu0 %v246
    %v250 = vpop.xlane.xlu0 %249
    %v251 = vmul.f32 %v248, 0.007874016
    %v252 = vmul.f32 %v250, 0.007874016
    %v253 = vrsqrt.pop %v251
    %v254 = vmul.f32 %v253, %v251
    %v255 = vmul.f32 %v254, %v253
    %v256 = vmul.f32 0.5, %v255
    %v257 = vsub.f32 1.5, %v256
    %v258 = vmul.f32 %v253, %v257
    %v259 = vmul.f32 %v251, %v258
    %vm260 = vcmp.eq.f32.partialorder %v251, inf
    %v261 = vsel %vm260, %v251, %v259
    %vm262 = vcmp.eq.f32.partialorder %v251, 0.0
    %v263 = vand.u32 %v251, 2147483648
    %v264 = vsel %vm262, %v263, %v261
    %v265 = vrsqrt.pop %v252
    %v266 = vmul.f32 %v265, %v252
    %v267 = vmul.f32 %v266, %v265
    %v268 = vmul.f32 0.5, %v267
    %v269 = vsub.f32 1.5, %v268
    %v270 = vmul.f32 %v265, %v269
    %v271 = vmul.f32 %v252, %v270
    %vm272 = vcmp.eq.f32.partialorder %v252, inf
    %v273 = vsel %vm272, %v252, %v271
    %vm274 = vcmp.eq.f32.partialorder %v252, 0.0
    %v275 = vand.u32 %v252, 2147483648
    %v276 = vsel %vm274, %v275, %v273
    %v277 = vadd.f32 %v264, 1e-06
    %v278 = vadd.f32 %v276, 1e-06
    %v279 = vrcp.pop %v277
    %v280 = vmul.f32 %v277, %v279
    %v281 = vsub.f32 1.0, %v280
    %v282 = vmul.f32 %v279, %v281
    %v283 = vadd.f32 %v279, %v282
    %vm284 = vweird.f32 %v277
    %vm285 = vweird.f32 %v279
    %vm286 = vmor %vm284, %vm285
    %v287 = vsel %vm286, %v279, %v283
    %v288 = vand.u32 2147483647, %v277
    %vm289 = vcmp.eq.f32.partialorder %v288, 8.507059e+37
    %v290 = vand.u32 %v277, 2147483648
    %v291 = vor.u32 1.1754944e-38, %v290
    %v292 = vsel %vm289, %v291, %v287
    %v293 = vrcp.pop %v278
    %v294 = vmul.f32 %v278, %v293
    %v295 = vsub.f32 1.0, %v294
    %v296 = vmul.f32 %v293, %v295
    %v297 = vadd.f32 %v293, %v296
    %vm298 = vweird.f32 %v278
    %vm299 = vweird.f32 %v293
    %vm300 = vmor %vm298, %vm299
    %v301 = vsel %vm300, %v293, %v297
    %v302 = vand.u32 2147483647, %v278
    %vm303 = vcmp.eq.f32.partialorder %v302, 8.507059e+37
    %v304 = vand.u32 %v278, 2147483648
    %v305 = vor.u32 1.1754944e-38, %v304
    %v306 = vsel %vm303, %v305, %v301
    %s307 = sld [smem:[#allocation2 + $0x2]]
    %v308 = vstv %s307
    %v309 = vmul.f32 %v308, %v292
    %v310 = vmul.f32 %v308, %v306
    %v311 = vmul.f32 %v243, %v309
    %v312 = vmul.f32 %v244, %v310
    %s313 = sld [smem:[#allocation6 + $0x2]]
    %v314 = vstv %s313
    %v315 = vadd.f32 %v311, %v314
    %v316 = vadd.f32 %v312, %v314
    %317 = vst [vmem:[#allocation9] sm:$0xff] %v315
    %318 = vst [vmem:[#allocation9 + $0x8] sm:$0xff] %v316
    // Predicated region
    $region26: #{decoder_forward.1} parent=1 // pred_check
      _
    $region27: #{decoder_forward.1} parent=1 // pred_check_branch
      %320 = sbr.rel (0) target = $region29
    $region28: #{decoder_forward.1} parent=1 // pred_region
      %322 = vsyncadd [#allocation4], 0
      %s323 = sshll.u32 [#allocation9], 4
      %s324 = int_to_ptr.vmem [resolvable:$true] %s323
      %s325 = sshll.u32 %s3, 4
      %s326 = int_to_ptr.hbm [resolvable:$true] %s325
      %331 = dma.vmem_to_hbm [thread:$0]  %s324, 256, %s326, [#allocation4], 128, 128, 8
    $region29: #{decoder_forward.1} parent=1 // pred_fallthru
      _
    // Predicated region
    $region30: #{decoder_forward.1} parent=1 // pred_check
      _
    $region31: #{decoder_forward.1} parent=1 // pred_check_branch
      %333 = sbr.rel (0) target = $region33
    $region32: #{decoder_forward.1} parent=1 // pred_region
      %335 = dma.done [#allocation4], 256
    $region33: #{decoder_forward.1} parent=1 // pred_fallthru
      _
    %336 = vsyncpa [#allocation3], 1
    %337 = vsyncpa [#allocation4], 1
    %338 = vsyncpa [#allocation5], 1
    %339 = vsyncpa [#allocation7], 1

</llo_original>
